<compile_context>
chip_gen: v7x
topology: tpu7x:2x2x1
jax: 0.10.0
libtpu: 0.0.40
codegen_flags: <defaults>
</compile_context>

<pallas_src>
from functools import partial

import jax
import jax.numpy as jnp
from jax.experimental import pallas as pl
from jax.experimental.pallas import tpu as pltpu


def _batch_tile(a1, max_tile=8):
    """Largest divisor of the batch that is <= max_tile (fat tiles, no edge pad)."""
    t = min(a1, max_tile)
    while a1 % t:
        t -= 1
    return t


# ----------------------------------------------------------------------------
# Kernel 1: per-capsule squared L2 norm over caps_dim (sublane reduction).
#   x block   : (A_TILE, caps_dim, num_caps)
#   out block : (A_TILE, 1, num_caps)
# ----------------------------------------------------------------------------
def _sqnorm_kernel(x_ref, o_ref):
    x = x_ref[...]                                        # (A_TILE, b, c)
    o_ref[...] = jnp.sum(x * x, axis=1, keepdims=True)    # sqrt deferred (monotone)


def pallas_capsule_sqnorms(x):
    a1, b, c = x.shape
    at = _batch_tile(a1)
    return pl.pallas_call(
        _sqnorm_kernel,
        out_shape=jax.ShapeDtypeStruct((a1, 1, c), x.dtype),
        grid=(a1 // at,),
        in_specs=[pl.BlockSpec((at, b, c), lambda i: (i, 0, 0))],
        out_specs=pl.BlockSpec((at, 1, c), lambda i: (i, 0, 0)),
        compiler_params=pltpu.CompilerParams(
            dimension_semantics=("parallel",)),
    )(x)


# ----------------------------------------------------------------------------
# Kernel 2: gather the selected capsules via in-kernel one-hot + MXU matmul.
#   idx block : (A_TILE, 1, W)   int32, tail columns pre-masked to -1
#   x block   : (A_TILE, caps_dim, num_caps)
#   out block : (A_TILE, caps_dim, W)   (W multiple of 128 -> lane-dense stores)
# sel[k, r] = (k == idx[r]); idx == -1 never matches -> those columns are 0.
# ----------------------------------------------------------------------------
def _gather_kernel(idx_ref, x_ref, o_ref):
    at, b, c = x_ref.shape
    w = o_ref.shape[-1]
    kk = jax.lax.broadcasted_iota(jnp.int32, (c, w), 0)   # kk[k, r] = k (hoisted)
    for a in range(at):                                   # static unroll, at <= 8
        sel = (kk == idx_ref[a]).astype(x_ref.dtype)      # (c, w) one-hot
        # HIGHEST precision -> bf16x3 decomposition; with an exact 0/1 one-hot
        # the MXU "gather" is bit-exact in f32.
        o_ref[a] = jnp.dot(
            x_ref[a], sel,
            preferred_element_type=jnp.float32,
            precision=jax.lax.Precision.HIGHEST,
        ).astype(o_ref.dtype)


@partial(jax.jit, static_argnames=("out_width",))
def _gather_padded(x, idx, capsnum, out_width):
    """Gather top-`capsnum` capsules into a lane-dense (a1, b, out_width) slab.

    `out_width` (static, multiple of 128) keys the compile; `capsnum` is a
    traced scalar, so varying capsnum within a bucket never recompiles.
    Columns >= capsnum are exactly zero (indices masked to -1).
    """
    a1, b, c = x.shape
    W = out_width
    at = _batch_tile(a1)

    idx = idx.astype(jnp.int32)
    if W > c:
        idx_w = jnp.pad(idx, ((0, 0), (0, W - c)), constant_values=-1)
    else:
        idx_w = idx[:, :W]
    col = jnp.arange(W, dtype=jnp.int32)[None, :]
    idx_w = jnp.where(col < capsnum, idx_w, -1).reshape(a1, 1, W)

    return pl.pallas_call(
        _gather_kernel,
        out_shape=jax.ShapeDtypeStruct((a1, b, W), x.dtype),
        grid=(a1 // at,),
        in_specs=[pl.BlockSpec((at, 1, W), lambda i: (i, 0, 0)),
                  pl.BlockSpec((at, b, c), lambda i: (i, 0, 0))],
        out_specs=pl.BlockSpec((at, b, W), lambda i: (i, 0, 0)),
        compiler_params=pltpu.CompilerParams(
            dimension_semantics=("parallel",)),
    )(idx_w, x)


# ----------------------------------------------------------------------------
# Stats path (single jit): Pallas squared norms -> descending top_k -> prop
# ----------------------------------------------------------------------------
@jax.jit
def _norm_sort_stats(x):
    a1, b, c = x.shape
    nsq = pallas_capsule_sqnorms(x)[:, 0, :]              # (a1, c) squared norms
    # torch.sort(a, dim=2, descending=True) equivalent; sqrt is monotone so
    # sorting squared norms gives identical indices/order.
    vals, idx = jax.lax.top_k(nsq, c)
    max_sq = vals[:, 0]                                   # a2[:, :, 0] ** 2
    med_sq = vals[:, c // 2]                              # torch.median (lower median) ** 2
    prop = jnp.mean(jnp.sqrt(med_sq / max_sq))            # mean over batch
    return prop, idx


def filter_high_forward(x, return_aux=False):
    """Mirrors Filter_high.forward.  x: (batch, caps_dim, num_caps) float32."""
    a1, b, c = x.shape
    num1 = c

    prop, idx = _norm_sort_stats(x)

    # capsnum defines the output width -> one host scalar (same sync PyTorch
    # eager does via `if prop*num1 > ...` and `int(knum)`).
    prop_raw = float(jax.device_get(prop))
    prop_f = prop_raw
    if prop_f * num1 > num1 * 0.8:
        prop_f = 0.8
    if prop_f * num1 < 0.1 * num1:
        prop_f = 0.1
    capsnum = int(prop_f * num1)
    if capsnum < 1:
        # TODO(synk): PyTorch would return an empty tensor here (num_caps < 10).
        capsnum = 1

    # Bucketed, lane-dense gather width: compile keyed on W only.
    W = ((capsnum + 127) // 128) * 128
    cap_padded = _gather_padded(x, idx, jnp.int32(capsnum), W)   # (a1, b, W)
    cap = cap_padded[:, :, :capsnum]                             # exact module width

    if return_aux:
        return cap, dict(prop_raw=prop_raw, prop=prop_f,
                         capsnum=capsnum, out_width=W, idx=idx)
    return cap


# ----------------------------------------------------------------------------
if __name__ == "__main__":
    key = jax.random.PRNGKey(0)
    # (batch, caps_dim, num_caps)
    x = jax.random.normal(key, (2, 16, 64), jnp.float32)

    cap, aux = filter_high_forward(x, return_aux=True)
    jax.block_until_ready(cap)

    a1, b, c = x.shape
    capsnum = aux["capsnum"]

    # ---- pure-JAX reference checks ------------------------------------------
    # norm / prop path
    norms_ref = jnp.sqrt(jnp.sum(x * x, axis=1))           # (a1, c)
    vals_ref, _ = jax.lax.top_k(norms_ref, c)
    prop_ref = float(jnp.mean(vals_ref[:, c // 2] / vals_ref[:, 0]))
    assert abs(aux["prop_raw"] - prop_ref) < 1e-4, (aux["prop_raw"], prop_ref)

    # gather path (same indices the kernel used -> checks the one-hot matmul)
    idx_top = aux["idx"][:, :capsnum]
    idx_b = jnp.broadcast_to(idx_top[:, None, :], (a1, b, capsnum))
    cap_ref = jnp.take_along_axis(x, idx_b, axis=2)

    assert cap.shape == (a1, b, capsnum), (cap.shape, capsnum)
    assert bool(jnp.all(jnp.isfinite(cap)))
    # precision=HIGHEST makes the one-hot matmul gather (bit-)exact; a wrong
    # capsule pick would show up as O(1) errors.
    err = float(jnp.max(jnp.abs(cap - cap_ref)))
    assert err <= 1e-5, err

    print("KERNEL_OK")
</pallas_src>

<mosaic_0001>
module attributes {stable_mosaic.version = 11 : i64} {
  func.func @_sqnorm_kernel(%arg0: i32, %arg1: memref<2x16x64xf32, #tpu.memory_space<vmem>>, %arg2: memref<2x1x64xf32, #tpu.memory_space<vmem>>) attributes {dimension_semantics = [#tpu.dimension_semantics<parallel>], iteration_bounds = array<i64: 1>, scalar_prefetch = 0 : i64, scratch_operands = 0 : i64, tpu.core_type = #tpu.core_type<tc>, window_params = [{transform_indices = @transform_0, window_bounds = array<i64: 2, 16, 64>}, {transform_indices = @transform_1, window_bounds = array<i64: 2, 1, 64>}]} {
    %c0 = arith.constant 0 : index
    %c0_0 = arith.constant 0 : index
    %c0_1 = arith.constant 0 : index
    %0 = vector.load %arg1[%c0, %c0_0, %c0_1] : memref<2x16x64xf32, #tpu.memory_space<vmem>>, vector<2x16x64xf32>
    %1 = arith.mulf %0, %0 : vector<2x16x64xf32>
    %cst = arith.constant dense<0.000000e+00> : vector<2x64xf32>
    %2 = vector.multi_reduction <add>, %1, %cst [1] : vector<2x16x64xf32> to vector<2x64xf32>
    %3 = vector.shape_cast %2 : vector<2x64xf32> to vector<2x1x64xf32>
    %c0_2 = arith.constant 0 : index
    %c0_3 = arith.constant 0 : index
    %c0_4 = arith.constant 0 : index
    %4 = vector.load %arg2[%c0_2, %c0_3, %c0_4] : memref<2x1x64xf32, #tpu.memory_space<vmem>>, vector<2x1x64xf32>
    tpu.vector_store %arg2[%c0_2, %c0_3, %c0_4], %3 {strides = array<i32>} : memref<2x1x64xf32, #tpu.memory_space<vmem>>, vector<2x1x64xf32>,
    return
  }
  func.func @transform_0(%arg0: i32) -> (i32, i32, i32) {
    %c0_i32 = arith.constant 0 : i32
    %c0_i32_0 = arith.constant 0 : i32
    %c0_i32_1 = arith.constant 0 : i32
    return %arg0, %c0_i32, %c0_i32_0 : i32, i32, i32
  }
  func.func @transform_1(%arg0: i32) -> (i32, i32, i32) {
    %c0_i32 = arith.constant 0 : i32
    %c0_i32_0 = arith.constant 0 : i32
    %c0_i32_1 = arith.constant 0 : i32
    return %arg0, %c0_i32, %c0_i32_0 : i32, i32, i32
  }
}

</mosaic_0001>

<llo_original>
// kernel: _norm_sort_stats.1
$region0: #{_norm_sort_stats.1}
  #allocation0 [shape = 'u32[]', space=smem, size = 0x4, offset = 0x4, fixed_abs, tag = 'smem constant byte address 0x4 - core index']
  #allocation1 [shape = 'u32[144,128]{1,0:T(1,128)}', space=vmem, size = 0x12000, scoped, tag = 'internal scratch']
  %s0 = inlined_call_operand.hbm [shape: f32[2,16,64], index: 0, kind: input, shape index: {}]
  %s1 = inlined_call_operand.vmem [shape: f32[2,1,64], index: 1, kind: output, shape index: {}]
  %s2 = sld [smem:[#allocation0]]
  $region18: #{_norm_sort_stats.1} parent=0
    _
  %s4 = ssub.s32 1, %s2
  %s5 = scalar_select 0, %s4, %s2
  $region1: #{_norm_sort_stats.1} parent=0
    #allocation2 [shape = 'u8[16384]{0}', space=vmem, size = 0x4000, scoped, tag = 'input window, operand 0, single buffered']
    #allocation3 [shape = 's32[1]{0}', space=sflag, size = 0x4, scoped, tag = 'scoped memory for _norm_sort_stats.1']
    %6 = vsyncpa [#allocation3], 0
    // Predicated region
    $region2: #{_norm_sort_stats.1} parent=1 // pred_check
      _
    $region3: #{_norm_sort_stats.1} parent=1 // pred_check_branch
      %8 = sbr.rel (0) target = $region5
    $region4: #{_norm_sort_stats.1} parent=1 // pred_region
      %s10 = ssub.s32 512, 512
      %11 = vsyncadd [#allocation3], %s10
      %s12 = sshll.u32 [#allocation2], 4
      %s13 = int_to_ptr.vmem [resolvable:$true] %s12
      %18 = dma.hbm_to_vmem [thread:$0]  %s0, 512, %s13, [#allocation3], 128, 128, 8
    $region5: #{_norm_sort_stats.1} parent=1 // pred_fallthru
      _
    // Predicated region
    $region6: #{_norm_sort_stats.1} parent=1 // pred_check
      _
    $region7: #{_norm_sort_stats.1} parent=1 // pred_check_branch
      %20 = sbr.rel (0) target = $region9
    $region8: #{_norm_sort_stats.1} parent=1 // pred_region
      %21 = dma.done [#allocation3], 512
    $region9: #{_norm_sort_stats.1} parent=1 // pred_fallthru
      _
    %v22 = vld [vmem:[#allocation2] sm:$0xff]
    %v23 = vld [vmem:[#allocation2 + $0x8] sm:$0xff]
    %v24 = vld [vmem:[#allocation2 + $0x10] sm:$0xff]
    %v25 = vld [vmem:[#allocation2 + $0x18] sm:$0xff]
    %v26 = vmul.f32 %v22, %v22
    %v27 = vmul.f32 %v23, %v23
    %v28 = vmul.f32 %v24, %v24
    %v29 = vmul.f32 %v25, %v25
    %vm30 = vcmask 523264
    %v31 = vsel %vm30, %v26, 0.0
    %v32 = vsel %vm30, %v27, 0.0
    %v33 = vadd.f32 %v31, %v32
    %v34 = vrot.slane %v33, 4
    %v35 = vadd.f32 %v33, %v34
    %v36 = vrot.slane %v35, 2
    %v37 = vadd.f32 %v35, %v36
    %v38 = vrot.slane %v37, 1
    %v39 = vadd.f32 %v37, %v38
    %v40 = vsel %vm30, %v28, 0.0
    %v41 = vsel %vm30, %v29, 0.0
    %v42 = vadd.f32 %v40, %v41
    %v43 = vrot.slane %v42, 4
    %v44 = vadd.f32 %v42, %v43
    %v45 = vrot.slane %v44, 2
    %v46 = vadd.f32 %v44, %v45
    %v47 = vrot.slane %v46, 1
    %v48 = vadd.f32 %v46, %v47
    %vm49 = vcmask 516096
    %50 = vst.msk [vmem:[%s1] sm:$0x1] %vm49, %v39
    %51 = vst.msk [vmem:[%s1 + $0x1] sm:$0x1] %vm49, %v48
    // Predicated region
    $region10: #{_norm_sort_stats.1} parent=1 // pred_check
      _
    $region11: #{_norm_sort_stats.1} parent=1 // pred_check_branch
      %53 = sbr.rel (0) target = $region13
    $region12: #{_norm_sort_stats.1} parent=1 // pred_region
      _
    $region13: #{_norm_sort_stats.1} parent=1 // pred_fallthru
      _
    // Predicated region
    $region14: #{_norm_sort_stats.1} parent=1 // pred_check
      _
    $region15: #{_norm_sort_stats.1} parent=1 // pred_check_branch
      %55 = sbr.rel (0) target = $region17
    $region16: #{_norm_sort_stats.1} parent=1 // pred_region
      _
    $region17: #{_norm_sort_stats.1} parent=1 // pred_fallthru
      _
    %56 = vsyncpa [#allocation3], 1

</llo_original>
